<compile_context>
chip_gen: v6e
topology: v6e:2x2x1
jax: 0.10.0
libtpu: 0.0.40
codegen_flags: <defaults>
</compile_context>

<pallas_src>
import jax
import jax.numpy as jnp
import numpy as np
from jax.experimental import pallas as pl
from jax.experimental.pallas import tpu as pltpu


def _make_scale_table(anchors, num_classes, stride):
    """Tiny per-(anchor,row) scale table: rows 0/1 -> stride, 2/3 -> aw/ah, rest -> 1."""
    nA = len(anchors)
    C5 = num_classes + 5
    scale = np.ones((nA, C5, 1), np.float32)
    scale[:, 0, 0] = stride
    scale[:, 1, 0] = stride
    anc = np.asarray(anchors, np.float32)
    scale[:, 2, 0] = anc[:, 0]
    scale[:, 3, 0] = anc[:, 1]
    return jnp.asarray(scale)


def _make_kernel(C5, GG, g, stride, Bt, At):
    inv_g = 1.0 / float(g)

    def kernel(pred_ref, scale_ref, out_ref):
        # Static per-row masks (sublane iota) and grid offsets (lane iota).
        # Hoisted out of the unrolled loop; pure VPU filler that hides under DMA.
        r = jax.lax.broadcasted_iota(jnp.int32, (C5, 1), 0)
        is_wh = (r == 2) | (r == 3)
        k = jax.lax.broadcasted_iota(jnp.int32, (1, GG), 1).astype(jnp.float32)
        gy = jnp.floor((k + 0.5) * inv_g)              # j  (exact: k, g small ints)
        gx = k - gy * g                                # i  (k = j*g + i)
        addend = (jnp.where(r == 0, gx, 0.0) +
                  jnp.where(r == 1, gy, 0.0)) * stride          # (C5, GG)

        for bi in range(Bt):
            for ai in range(At):
                p = pred_ref[bi, ai].astype(jnp.float32)        # (C5, GG)
                t = jnp.exp(-p)                                 # single transcendental
                # wh rows: exp(p) = 1/t ; other rows: sigmoid(p) = 1/(1+t)
                denom = jnp.where(is_wh, t, 1.0 + t)
                val = pl.reciprocal(denom, approx=False)
                o = val * scale_ref[ai] + addend                # (C5, GG)
                # Fused layout change: store (GG, C5) so the wrapper needs no
                # HBM round-trip transpose (lane-width-C5 masked stores only
                # cost vreg->VMEM, the HBM write stays contiguous).
                out_ref[bi, ai] = o.T.astype(out_ref.dtype)

    return kernel


def make_predict_layer(anchors, num_classes, img_size, out_dtype=jnp.float32):
    """Returns forward(x) reproducing PredictLayer.forward(x, targets=None, img_size=img_size)."""
    nA = len(anchors)
    C5 = num_classes + 5

    @jax.jit
    def forward(x):
        nB, ch, g, g2 = x.shape
        assert g == g2 and ch == nA * C5, "input must be (nB, nA*(5+C), g, g)"
        GG = g * g
        stride = float(img_size) / float(g)

        scale = _make_scale_table(anchors, num_classes, stride)
        pred4 = x.reshape(nB, nA, C5, GG)              # free reshape (channels-first)

        # Block heuristic: biggest batch tile with <= ~4 MiB of input per block
        # and <= ~24 MiB of double-buffered VMEM (in + lane-padded out).
        c5_pad = -(-C5 // 128) * 128

        def vmem_need(bt, at):
            return 2 * (bt * at * C5 * GG * 4 + bt * at * GG * c5_pad * 4)

        Bt = 1
        for cand in range(nB, 0, -1):
            if nB % cand:
                continue
            if cand * nA * C5 * GG * 4 <= (4 << 20) and vmem_need(cand, nA) <= (24 << 20):
                Bt = cand
                break
        # Second parallel axis (anchors) only when the batch axis has a single
        # step, so both v7x TensorCores get work even at nB == 1.
        At = nA if (nB // Bt) >= 2 or nA < 2 else 1

        kernel = _make_kernel(C5, GG, g, stride, Bt, At)

        out4 = pl.pallas_call(
            kernel,
            out_shape=jax.ShapeDtypeStruct((nB, nA, GG, C5), out_dtype),
            grid_spec=pltpu.PrefetchScalarGridSpec(
                num_scalar_prefetch=0,
                grid=(nB // Bt, nA // At),
                in_specs=[
                    pl.BlockSpec((Bt, At, C5, GG), lambda b, a: (b, a, 0, 0)),
                    pl.BlockSpec((At, C5, 1), lambda b, a: (a, 0, 0)),
                ],
                out_specs=pl.BlockSpec((Bt, At, GG, C5), lambda b, a: (b, a, 0, 0)),
            ),
            compiler_params=pltpu.CompilerParams(
                dimension_semantics=("parallel", "parallel"),
                vmem_limit_bytes=48 * 1024 * 1024),
        )(pred4, scale)

        # Free reshape: (nB, nA, GG, C5) -> (nB, nA*GG, 5+C)  (torch's cat/view layout).
        output = out4.reshape(nB, nA * GG, C5)
        return output, 0

    return forward


def reference_forward(x, anchors, num_classes, img_size):
    """Pure-JAX mirror of the PyTorch forward (targets=None) for verification."""
    nA = len(anchors)
    C5 = num_classes + 5
    nB, ch, g, _ = x.shape
    stride = float(img_size) / float(g)
    pred = x.reshape(nB, nA, C5, g, g).transpose(0, 1, 3, 4, 2)  # (nB, nA, g, g, 5+C)
    sx = jax.nn.sigmoid(pred[..., 0])
    sy = jax.nn.sigmoid(pred[..., 1])
    w = pred[..., 2]
    h = pred[..., 3]
    conf = jax.nn.sigmoid(pred[..., 4])
    cls = jax.nn.sigmoid(pred[..., 5:])
    grid_x = jnp.arange(g, dtype=jnp.float32).reshape(1, 1, 1, g)  # [..., j, i] = i
    grid_y = jnp.arange(g, dtype=jnp.float32).reshape(1, 1, g, 1)  # [..., j, i] = j
    sa = jnp.asarray([(aw / stride, ah / stride) for aw, ah in anchors], jnp.float32)
    anchor_w = sa[:, 0].reshape(1, nA, 1, 1)
    anchor_h = sa[:, 1].reshape(1, nA, 1, 1)
    bx = sx + grid_x
    by = sy + grid_y
    bw = jnp.exp(w) * anchor_w
    bh = jnp.exp(h) * anchor_h
    boxes = jnp.stack([bx, by, bw, bh], axis=-1)
    out = jnp.concatenate(
        [boxes.reshape(nB, -1, 4) * stride,
         conf.reshape(nB, -1, 1),
         cls.reshape(nB, -1, num_classes)], axis=-1)
    return out


if __name__ == "__main__":
    # small, deterministic config
    anchors = [(10.0, 13.0), (16.0, 30.0), (33.0, 23.0)]
    num_classes = 3
    img_size = 128
    nA = len(anchors)
    nB, g = 2, 16
    C5 = num_classes + 5

    key = jax.random.PRNGKey(0)
    x = jax.random.normal(key, (nB, nA * C5, g, g), dtype=jnp.float32)

    forward = make_predict_layer(anchors, num_classes, img_size)
    output, loss = forward(x)
    output = jax.block_until_ready(output)

    ref = jax.block_until_ready(reference_forward(x, anchors, num_classes, img_size))
    assert output.shape == (nB, nA * g * g, C5), output.shape
    np.testing.assert_allclose(np.asarray(output), np.asarray(ref), rtol=1e-5, atol=1e-5)
    assert loss == 0

    print("KERNEL_OK")
</pallas_src>

<mosaic_0001>
module attributes {stable_mosaic.version = 11 : i64} {
  func.func @kernel(%arg0: i32, %arg1: i32, %arg2: memref<2x1x8x256xf32, #tpu.memory_space<vmem>>, %arg3: memref<1x8x1xf32, #tpu.memory_space<vmem>>, %arg4: memref<2x1x256x8xf32, #tpu.memory_space<vmem>>) attributes {dimension_semantics = [#tpu.dimension_semantics<parallel>, #tpu.dimension_semantics<parallel>], iteration_bounds = array<i64: 1, 3>, scalar_prefetch = 0 : i64, scratch_operands = 0 : i64, tpu.core_type = #tpu.core_type<tc>, window_params = [{transform_indices = @transform_0, window_bounds = array<i64: 2, 1, 8, 256>}, {transform_indices = @transform_1, window_bounds = array<i64: 1, 8, 1>}, {transform_indices = @transform_2, window_bounds = array<i64: 2, 1, 256, 8>}]} {
    %0 = tpu.iota {dimensions = array<i32: 0>} : vector<8x1xi32>
    %c2_i32 = arith.constant 2 : i32
    %1 = vector.broadcast %c2_i32 : i32 to vector<8x1xi32>
    %2 = arith.cmpi eq, %0, %1 : vector<8x1xi32>
    %c3_i32 = arith.constant 3 : i32
    %3 = vector.broadcast %c3_i32 : i32 to vector<8x1xi32>
    %4 = arith.cmpi eq, %0, %3 : vector<8x1xi32>
    %5 = arith.ori %2, %4 : vector<8x1xi1>
    %6 = tpu.iota {dimensions = array<i32: 1>} : vector<1x256xi32>
    %7 = arith.sitofp %6 : vector<1x256xi32> to vector<1x256xf32>
    %cst = arith.constant 5.000000e-01 : f32
    %8 = vector.broadcast %cst : f32 to vector<1x256xf32>
    %9 = arith.addf %7, %8 : vector<1x256xf32>
    %cst_0 = arith.constant 6.250000e-02 : f32
    %10 = vector.broadcast %cst_0 : f32 to vector<1x256xf32>
    %11 = arith.mulf %9, %10 : vector<1x256xf32>
    %12 = math.floor %11 : vector<1x256xf32>
    %cst_1 = arith.constant 1.600000e+01 : f32
    %13 = vector.broadcast %cst_1 : f32 to vector<1x256xf32>
    %14 = arith.mulf %12, %13 : vector<1x256xf32>
    %15 = arith.subf %7, %14 : vector<1x256xf32>
    %c0_i32 = arith.constant 0 : i32
    %16 = vector.broadcast %c0_i32 : i32 to vector<8x1xi32>
    %17 = arith.cmpi eq, %0, %16 : vector<8x1xi32>
    %cst_2 = arith.constant 0.000000e+00 : f32
    %18 = vector.shape_cast %17 : vector<8x1xi1> to vector<8x1xi1>
    %19 = vector.broadcast %18 : vector<8x1xi1> to vector<8x256xi1>
    %20 = vector.shape_cast %15 : vector<1x256xf32> to vector<1x256xf32>
    %21 = vector.broadcast %20 : vector<1x256xf32> to vector<8x256xf32>
    %22 = vector.broadcast %cst_2 : f32 to vector<8x256xf32>
    %23 = arith.select %19, %21, %22 : vector<8x256xi1>, vector<8x256xf32>
    %c1_i32 = arith.constant 1 : i32
    %24 = vector.broadcast %c1_i32 : i32 to vector<8x1xi32>
    %25 = arith.cmpi eq, %0, %24 : vector<8x1xi32>
    %cst_3 = arith.constant 0.000000e+00 : f32
    %26 = vector.shape_cast %25 : vector<8x1xi1> to vector<8x1xi1>
    %27 = vector.broadcast %26 : vector<8x1xi1> to vector<8x256xi1>
    %28 = vector.shape_cast %12 : vector<1x256xf32> to vector<1x256xf32>
    %29 = vector.broadcast %28 : vector<1x256xf32> to vector<8x256xf32>
    %30 = vector.broadcast %cst_3 : f32 to vector<8x256xf32>
    %31 = arith.select %27, %29, %30 : vector<8x256xi1>, vector<8x256xf32>
    %32 = arith.addf %23, %31 : vector<8x256xf32>
    %cst_4 = arith.constant 8.000000e+00 : f32
    %33 = vector.broadcast %cst_4 : f32 to vector<8x256xf32>
    %34 = arith.mulf %32, %33 : vector<8x256xf32>
    %c0 = arith.constant 0 : index
    %c0_5 = arith.constant 0 : index
    %c0_6 = arith.constant 0 : index
    %c0_7 = arith.constant 0 : index
    %35 = vector.load %arg2[%c0, %c0_5, %c0_6, %c0_7] : memref<2x1x8x256xf32, #tpu.memory_space<vmem>>, vector<1x1x8x256xf32>
    %36 = vector.shape_cast %35 : vector<1x1x8x256xf32> to vector<8x256xf32>
    %cst_8 = arith.constant 0.000000e+00 : f32
    %37 = vector.broadcast %cst_8 : f32 to vector<8x256xf32>
    %38 = arith.subf %37, %36 : vector<8x256xf32>
    %39 = math.exp %38 : vector<8x256xf32>
    %cst_9 = arith.constant 1.000000e+00 : f32
    %40 = vector.broadcast %cst_9 : f32 to vector<8x256xf32>
    %41 = arith.addf %40, %39 : vector<8x256xf32>
    %42 = vector.shape_cast %5 : vector<8x1xi1> to vector<8x1xi1>
    %43 = vector.broadcast %42 : vector<8x1xi1> to vector<8x256xi1>
    %44 = arith.select %43, %39, %41 : vector<8x256xi1>, vector<8x256xf32>
    %45 = tpu.reciprocal %44 : vector<8x256xf32> -> vector<8x256xf32>
    %c0_10 = arith.constant 0 : index
    %c0_11 = arith.constant 0 : index
    %c0_12 = arith.constant 0 : index
    %46 = vector.load %arg3[%c0_10, %c0_11, %c0_12] : memref<1x8x1xf32, #tpu.memory_space<vmem>>, vector<1x8x1xf32>
    %47 = vector.shape_cast %46 : vector<1x8x1xf32> to vector<8x1xf32>
    %48 = vector.broadcast %47 : vector<8x1xf32> to vector<8x256xf32>
    %49 = arith.mulf %45, %48 : vector<8x256xf32>
    %50 = arith.addf %49, %34 : vector<8x256xf32>
    %51 = tpu.transpose %50, [1, 0] : vector<8x256xf32> -> vector<256x8xf32>
    %c0_13 = arith.constant 0 : index
    %c0_14 = arith.constant 0 : index
    %c0_15 = arith.constant 0 : index
    %c0_16 = arith.constant 0 : index
    %52 = vector.load %arg4[%c0_13, %c0_14, %c0_15, %c0_16] : memref<2x1x256x8xf32, #tpu.memory_space<vmem>>, vector<1x1x256x8xf32>
    %53 = vector.shape_cast %52 : vector<1x1x256x8xf32> to vector<256x8xf32>
    %54 = vector.shape_cast %51 : vector<256x8xf32> to vector<1x1x256x8xf32>
    tpu.vector_store %arg4[%c0_13, %c0_14, %c0_15, %c0_16], %54 {strides = array<i32>} : memref<2x1x256x8xf32, #tpu.memory_space<vmem>>, vector<1x1x256x8xf32>,
    %c1 = arith.constant 1 : index
    %c0_17 = arith.constant 0 : index
    %c0_18 = arith.constant 0 : index
    %c0_19 = arith.constant 0 : index
    %55 = vector.load %arg2[%c1, %c0_17, %c0_18, %c0_19] : memref<2x1x8x256xf32, #tpu.memory_space<vmem>>, vector<1x1x8x256xf32>
    %56 = vector.shape_cast %55 : vector<1x1x8x256xf32> to vector<8x256xf32>
    %cst_20 = arith.constant 0.000000e+00 : f32
    %57 = vector.broadcast %cst_20 : f32 to vector<8x256xf32>
    %58 = arith.subf %57, %56 : vector<8x256xf32>
    %59 = math.exp %58 : vector<8x256xf32>
    %cst_21 = arith.constant 1.000000e+00 : f32
    %60 = vector.broadcast %cst_21 : f32 to vector<8x256xf32>
    %61 = arith.addf %60, %59 : vector<8x256xf32>
    %62 = vector.shape_cast %5 : vector<8x1xi1> to vector<8x1xi1>
    %63 = vector.broadcast %62 : vector<8x1xi1> to vector<8x256xi1>
    %64 = arith.select %63, %59, %61 : vector<8x256xi1>, vector<8x256xf32>
    %65 = tpu.reciprocal %64 : vector<8x256xf32> -> vector<8x256xf32>
    %c0_22 = arith.constant 0 : index
    %c0_23 = arith.constant 0 : index
    %c0_24 = arith.constant 0 : index
    %66 = vector.load %arg3[%c0_22, %c0_23, %c0_24] : memref<1x8x1xf32, #tpu.memory_space<vmem>>, vector<1x8x1xf32>
    %67 = vector.shape_cast %66 : vector<1x8x1xf32> to vector<8x1xf32>
    %68 = vector.broadcast %67 : vector<8x1xf32> to vector<8x256xf32>
    %69 = arith.mulf %65, %68 : vector<8x256xf32>
    %70 = arith.addf %69, %34 : vector<8x256xf32>
    %71 = tpu.transpose %70, [1, 0] : vector<8x256xf32> -> vector<256x8xf32>
    %c1_25 = arith.constant 1 : index
    %c0_26 = arith.constant 0 : index
    %c0_27 = arith.constant 0 : index
    %c0_28 = arith.constant 0 : index
    %72 = vector.load %arg4[%c1_25, %c0_26, %c0_27, %c0_28] : memref<2x1x256x8xf32, #tpu.memory_space<vmem>>, vector<1x1x256x8xf32>
    %73 = vector.shape_cast %72 : vector<1x1x256x8xf32> to vector<256x8xf32>
    %74 = vector.shape_cast %71 : vector<256x8xf32> to vector<1x1x256x8xf32>
    tpu.vector_store %arg4[%c1_25, %c0_26, %c0_27, %c0_28], %74 {strides = array<i32>} : memref<2x1x256x8xf32, #tpu.memory_space<vmem>>, vector<1x1x256x8xf32>,
    return
  }
  func.func @transform_0(%arg0: i32, %arg1: i32) -> (i32, i32, i32, i32) {
    %c0_i32 = arith.constant 0 : i32
    %c0_i32_0 = arith.constant 0 : i32
    %c0_i32_1 = arith.constant 0 : i32
    return %arg0, %arg1, %c0_i32, %c0_i32_0 : i32, i32, i32, i32
  }
  func.func @transform_1(%arg0: i32, %arg1: i32) -> (i32, i32, i32) {
    %c0_i32 = arith.constant 0 : i32
    %c0_i32_0 = arith.constant 0 : i32
    %c0_i32_1 = arith.constant 0 : i32
    return %arg1, %c0_i32, %c0_i32_0 : i32, i32, i32
  }
  func.func @transform_2(%arg0: i32, %arg1: i32) -> (i32, i32, i32, i32) {
    %c0_i32 = arith.constant 0 : i32
    %c0_i32_0 = arith.constant 0 : i32
    %c0_i32_1 = arith.constant 0 : i32
    return %arg0, %arg1, %c0_i32, %c0_i32_0 : i32, i32, i32, i32
  }
}

</mosaic_0001>

<llo_original>
// kernel: forward.1
$region0: #{forward.1}
  #allocation0 [shape = 'u32[]', space=smem, size = 0x4, offset = 0x4, fixed_abs, tag = 'smem constant byte address 0x4 - core index']
  #allocation1 [shape = 'u32[144,128]{1,0:T(1,128)}', space=vmem, size = 0x12000, scoped, tag = 'internal scratch']
  %s0 = inlined_call_operand.vmem [shape: f32[2,3,8,256], index: 0, kind: input, shape index: {}]
  %s1 = inlined_call_operand.vmem [shape: f32[3,8,1], index: 1, kind: input, shape index: {}]
  %s2 = inlined_call_operand.vmem [shape: f32[2,3,256,8], index: 2, kind: output, shape index: {}]
  %s3 = sld [smem:[#allocation0]]
  $region98: #{forward.1} parent=0
    _
  %s5 = ssub.s32 1, %s3
  %s6 = scalar_select 0, %s5, %s3
  $region1: #{forward.1} parent=0
    #allocation2 [shape = 'u8[32768]{0}', space=vmem, size = 0x8000, scoped, tag = 'input window, operand 0']
    #allocation3 [shape = 'u8[524288]{0}', space=vmem, size = 0x80000, scoped, tag = 'output window, operand 0']
    loop: start=0, step=1, limit=5
    $region2: #{forward.1} parent=1 // loop_pre_header
      _
    $region3: #{forward.1} parent=1 // loop_header
      %s8 = sphi 0, %s12
      %p9 = scmp.ge.s32.totalorder %s8, 5
      %s15 = sphi 0, %s27
      %s16 = sphi 0, %s23
      %s17 = sphi 0, %s15
      %s18 = sphi 0, %s16
      %s19 = sphi 0, %s17
      %s20 = sphi 0, %s18
      %s32 = sphi 0, %s34
      %s35 = sphi 0, %s32
      %s36 = sphi 0, %s35
      %s52 = sphi 0, %s36
      %s58 = sphi 0, %s60
      %s61 = sphi 0, %s58
      %s62 = sphi 0, %s61
      %s78 = sphi 0, %s62
      %s86 = sphi 0, %s88
      %s89 = sphi 0, %s86
      %s90 = sphi 0, %s89
      %s106 = sphi 0, %s90
    $region4: #{forward.1} parent=1 // loop_header_branch
      %11 = sbr.rel (%p9) target = $region8
    $region5: #{forward.1} parent=1 // loop_body
      %s13 = ssub.s32 %s8, 1
      %s14 = ssub.s32 %s8, 2
      %s21 = sadd.s32 1, %s16
      %p22 = scmp.ge.s32.totalorder %s21, 3
      %s23 = scalar_select %p22, 0, %s21
      %s24 = sadd.s32 1, %s15
      %s25 = scalar_select %p22, %s24, %s15
      %p26 = scmp.ge.s32.totalorder %s25, 1
      %s27 = scalar_select %p26, 0, %s25
      %s28 = ssub.s32 %s15, %s27
      %s29 = ssub.s32 %s16, %s23
      %s30 = sor.u32 %s28, %s29
      %p31 = scmp.eq.s32.totalorder %s30, 0
      %s33 = sadd.s32 %s32, 1
      %s34 = scalar_select %p31, %s32, %s33
      %p37 = pneg %p31
      %p38 = scmp.eq.s32.totalorder %s8, 2
      %p39 = por %p37, %p38
      %p40 = scmp.ne.s32.totalorder %s32, %s35
      %p41 = scmp.eq.s32.totalorder %s8, 0
      %p42 = por %p40, %p41
      %p43 = scmp.ne.s32.totalorder %s32, %s35
      %p44 = scmp.eq.s32.totalorder %s13, 2
      %p45 = por %p43, %p44
      %p46 = scmp.ne.s32.totalorder %s35, %s36
      %p47 = scmp.eq.s32.totalorder %s13, 0
      %p48 = por %p46, %p47
      %p49 = scmp.ne.s32.totalorder %s35, %s36
      %p50 = scmp.eq.s32.totalorder %s14, 2
      %p51 = por %p49, %p50
      %p53 = scmp.ne.s32.totalorder %s36, %s52
      %p54 = scmp.eq.s32.totalorder %s14, 0
      %p55 = por %p53, %p54
      %s56 = ssub.s32 %s16, %s23
      %p57 = scmp.eq.s32.totalorder %s56, 0
      %s59 = sadd.s32 %s58, 1
      %s60 = scalar_select %p57, %s58, %s59
      %p63 = pneg %p57
      %p64 = scmp.eq.s32.totalorder %s8, 2
      %p65 = por %p63, %p64
      %p66 = scmp.ne.s32.totalorder %s58, %s61
      %p67 = scmp.eq.s32.totalorder %s8, 0
      %p68 = por %p66, %p67
      %p69 = scmp.ne.s32.totalorder %s58, %s61
      %p70 = scmp.eq.s32.totalorder %s13, 2
      %p71 = por %p69, %p70
      %p72 = scmp.ne.s32.totalorder %s61, %s62
      %p73 = scmp.eq.s32.totalorder %s13, 0
      %p74 = por %p72, %p73
      %p75 = scmp.ne.s32.totalorder %s61, %s62
      %p76 = scmp.eq.s32.totalorder %s14, 2
      %p77 = por %p75, %p76
      %p79 = scmp.ne.s32.totalorder %s62, %s78
      %p80 = scmp.eq.s32.totalorder %s14, 0
      %p81 = por %p79, %p80
      %s82 = ssub.s32 %s15, %s27
      %s83 = ssub.s32 %s16, %s23
      %s84 = sor.u32 %s82, %s83
      %p85 = scmp.eq.s32.totalorder %s84, 0
      %s87 = sadd.s32 %s86, 1
      %s88 = scalar_select %p85, %s86, %s87
      %p91 = pneg %p85
      %p92 = scmp.eq.s32.totalorder %s8, 2
      %p93 = por %p91, %p92
      %p94 = scmp.ne.s32.totalorder %s86, %s89
      %p95 = scmp.eq.s32.totalorder %s8, 0
      %p96 = por %p94, %p95
      %p97 = scmp.ne.s32.totalorder %s86, %s89
      %p98 = scmp.eq.s32.totalorder %s13, 2
      %p99 = por %p97, %p98
      %p100 = scmp.ne.s32.totalorder %s89, %s90
      %p101 = scmp.eq.s32.totalorder %s13, 0
      %p102 = por %p100, %p101
      %p103 = scmp.ne.s32.totalorder %s89, %s90
      %p104 = scmp.eq.s32.totalorder %s14, 2
      %p105 = por %p103, %p104
      %p107 = scmp.ne.s32.totalorder %s90, %s106
      %p108 = scmp.eq.s32.totalorder %s14, 0
      %p109 = por %p107, %p108
      %p110 = scmp.le.s32.totalorder 1, %s8
      %p111 = scmp.lt.s32.totalorder %s8, 4
      %p112 = pnand %p110, %p111
      %p113 = pneg %p112
      // Predicated region
      $region9: #{forward.1} parent=5 // pred_check
        _
      $region10: #{forward.1} parent=5 // pred_check_branch
        %115 = sbr.rel (%p112) target = $region12
      $region11: #{forward.1} parent=5 // pred_region
        %s116 = ssub.s32 %s8, 1
      $region12: #{forward.1} parent=5 // pred_fallthru
        _
      %p117 = scmp.lt.s32.totalorder %s8, 3
      // Predicated region
      $region13: #{forward.1} parent=5 // pred_check
        %p118 = pneg %p117
      $region14: #{forward.1} parent=5 // pred_check_branch
        %120 = sbr.rel (%p118) target = $region16
      $region15: #{forward.1} parent=5 // pred_region
        // Predicated region
        $region17: #{forward.1} parent=15 // pred_check
          %p121 = pneg %p42
        $region18: #{forward.1} parent=15 // pred_check_branch
          %123 = sbr.rel (%p121) target = $region20
        $region19: #{forward.1} parent=15 // pred_region
          %s124 = sand.u32 %s32, 1
          %s125 = sand.u32 %s32, 1
          %s126 = smul.addr %s125, 32
          %s127 = scalar_lea.vmem [#allocation2], %s126
          %s128 = smul.u32 2, %s15
          %s129 = smul.addr %s16, 2
          %s130 = smul.addr %s128, 6
          %s131 = sadd.s32 %s129, %s130
          %s132 = smul.addr %s131, 8
          %s133 = scalar_lea.vmem %s0, %s132
          // Predicated region
          $region21: #{forward.1} parent=19 // pred_check
            _
          $region22: #{forward.1} parent=19 // pred_check_branch
            %135 = sbr.rel (0) target = $region24
          $region23: #{forward.1} parent=19 // pred_region
            // Predicated region
            $region25: #{forward.1} parent=23 // pred_check
              _
            $region26: #{forward.1} parent=23 // pred_check_branch
              %137 = sbr.rel (0) target = $region28
            $region27: #{forward.1} parent=23 // pred_region
              loop: start=0, step=1, limit=1
              $region29: #{forward.1} parent=27 // loop_pre_header
                _
              $region30: #{forward.1} parent=27 // loop_header
                %s139 = sphi 0, %s143
                %p140 = scmp.ge.s32.totalorder %s139, 1
                %s144 = sphi %s133, %s133
                %s145 = sphi %s127, %s127
              $region31: #{forward.1} parent=27 // loop_header_branch
                %142 = sbr.rel (%p140) target = $region35
              $region32: #{forward.1} parent=27 // loop_body
                %v146 = vld [vmem:[%s144] sm:$0xff]
                %147 = vst [vmem:[%s145] sm:$0xff] %v146
                %v148 = vld [vmem:[%s144 + $0x8] sm:$0xff]
                %149 = vst [vmem:[%s145 + $0x8] sm:$0xff] %v148
                %v150 = vld [vmem:[%s144 + $0x30] sm:$0xff]
                %151 = vst [vmem:[%s145 + $0x10] sm:$0xff] %v150
                %v152 = vld [vmem:[%s144 + $0x38] sm:$0xff]
                %153 = vst [vmem:[%s145 + $0x18] sm:$0xff] %v152
              $region33: #{forward.1} parent=27 // loop_footer
                %s143 = sadd.s32 1, %s139
              $region34: #{forward.1} parent=27 // loop_footer_branch
                %138 = sbr.rel target = $region30
              $region35: #{forward.1} parent=27 // loop_exit
                _
            $region28: #{forward.1} parent=23 // pred_fallthru
              _
            // Predicated region
            $region36: #{forward.1} parent=23 // pred_check
              _
            $region37: #{forward.1} parent=23 // pred_check_branch
              %155 = sbr.rel target = $region39
            $region38: #{forward.1} parent=23 // pred_region
              _
            $region39: #{forward.1} parent=23 // pred_fallthru
              _
          $region24: #{forward.1} parent=19 // pred_fallthru
            _
          %156 = vnop
        $region20: #{forward.1} parent=15 // pred_fallthru
          _
        // Predicated region
        $region40: #{forward.1} parent=15 // pred_check
          %p157 = pneg %p68
        $region41: #{forward.1} parent=15 // pred_check_branch
          %159 = sbr.rel (%p157) target = $region43
        $region42: #{forward.1} parent=15 // pred_region
          %p160 = scmp.lt.s32.totalorder %s16, 2
          %s161 = scalar_select %p160, %s16, 2
          %s162 = smul.addr %s161, 8
          %s163 = scalar_lea.vmem %s1, %s162
        $region43: #{forward.1} parent=15 // pred_fallthru
          _
      $region16: #{forward.1} parent=5 // pred_fallthru
        _
      %p164 = scmp.le.s32.totalorder 1, %s8
      %p165 = scmp.lt.s32.totalorder %s8, 4
      %p166 = pnand %p164, %p165
      %p167 = pneg %p166
      // Predicated region
      $region44: #{forward.1} parent=5 // pred_check
        _
      $region45: #{forward.1} parent=5 // pred_check_branch
        %169 = sbr.rel (%p166) target = $region47
      $region46: #{forward.1} parent=5 // pred_region
        %s170 = ssub.s32 %s8, 1
        %s171 = sand.u32 %s35, 1
        %s172 = sand.u32 %s35, 1
        %s173 = smul.addr %s172, 32
        %s174 = scalar_lea.vmem [#allocation2], %s173
        // Predicated region
        $region48: #{forward.1} parent=46 // pred_check
          %p175 = pneg %p48
        $region49: #{forward.1} parent=46 // pred_check_branch
          %177 = sbr.rel (%p175) target = $region51
        $region50: #{forward.1} parent=46 // pred_region
          _
        $region51: #{forward.1} parent=46 // pred_fallthru
          _
        %s178 = sand.u32 %s35, 1
        %s179 = sand.u32 %s35, 1
        %s180 = smul.addr %s179, 32
        %s181 = scalar_lea.vmem [#allocation2], %s180
        %p182 = pneg %p48
        %p183 = pneg %p45
        %p184 = scmp.lt.s32.totalorder %s18, 2
        %s185 = scalar_select %p184, %s18, 2
        %s186 = smul.addr %s185, 8
        %s187 = scalar_lea.vmem %s1, %s186
        %p188 = pneg %p74
        %p189 = pneg %p71
        %p190 = pneg %p102
        %p191 = pneg %p99
        %s192 = sand.u32 %s89, 1
        %s193 = sand.u32 %s89, 1
        %s194 = smul.addr %s193, 512
        %s195 = scalar_lea.vmem [#allocation3], %s194
        %s196 = smul.u32 2, %s17
        %p197 = scmp.lt.s32.totalorder %s18, 2
        %s198 = scalar_select %p197, %s18, 2
        %s199 = smul.addr %s198, 8
        %s200 = scalar_lea.vmem %s1, %s199
        %s201 = smul.u32 2, %s17
        %v202 = vlaneseq
        %v203 = vshrl.u32 %v202, 7
        %vm204 = vcmp.eq.s32.totalorder %v203, 2
        %vm205 = vcmp.eq.s32.totalorder %v203, 3
        %vm206 = vmor %vm204, %vm205
        %v207 = vlaneseq
        %v208 = vand.u32 %v207, 127
        %v209 = vadd.s32 %v208, 128
        %v210 = vcvt.s32.f32 %v208
        %v211 = vcvt.s32.f32 %v209
        %v212 = vadd.f32 %v210, 0.5
        %v213 = vadd.f32 %v211, 0.5
        %v214 = vmul.f32 %v212, 0.0625
        %v215 = vmul.f32 %v213, 0.0625
        %v216 = vfloor.f32 %v214
        %v217 = vfloor.f32 %v215
        %v218 = vmul.f32 %v216, 16.0
        %v219 = vmul.f32 %v217, 16.0
        %v220 = vsub.f32 %v210, %v218
        %v221 = vsub.f32 %v211, %v219
        %vm222 = vcmp.eq.s32.totalorder %v203, 0
        %v223 = vsel %vm222, 1, 0
        %vm224 = vcmp.eq.s32.totalorder %v223, 1
        %v225 = vsel %vm224, %v220, 0.0
        %v226 = vsel %vm224, %v221, 0.0
        %vm227 = vcmp.eq.s32.totalorder %v203, 1
        %v228 = vsel %vm227, 1, 0
        %vm229 = vcmp.eq.s32.totalorder %v228, 1
        %v230 = vsel %vm229, %v216, 0.0
        %v231 = vsel %vm229, %v217, 0.0
        %v232 = vadd.f32 %v225, %v230
        %v233 = vadd.f32 %v226, %v231
        %v234 = vmul.f32 %v232, 8.0
        %v235 = vmul.f32 %v233, 8.0
        %v236 = vld [vmem:[%s174] sm:$0xff]
        %v237 = vld [vmem:[%s174 + $0x8] sm:$0xff]
        %v238 = vsub.f32 0.0, %v236
        %v239 = vsub.f32 0.0, %v237
        %v240 = vmul.f32 %v238, 1.442695
        %v241 = vpow.pop %v240
        %v242 = vmul.f32 %v239, 1.442695
        %v243 = vpow.pop %v242
        %v244 = vadd.f32 %v241, 1.0
        %v245 = vadd.f32 %v243, 1.0
        %v246 = vsel %vm206, 1, 0
        %vm247 = vcmp.eq.s32.totalorder %v246, 1
        %v248 = vsel %vm247, %v241, %v244
        %v249 = vsel %vm247, %v243, %v245
        %v250 = vrcp.pop %v248
        %v251 = vrcp.pop %v249
        %v252 = vld [vmem:[%s200] sm:$0xff]
        %254 = vset.pattern.permute.xlu0 0
        %255 = vperm.xlu0 %254, %v252
        %v256 = vpop.permute.xlu0 %255
        %v258 = vmul.f32 %v250, %v256
        %v259 = vmul.f32 %v251, %v256
        %v260 = vadd.f32 %v258, %v234
        %v261 = vadd.f32 %v259, %v235
        %262 = vxpose.xlu0.b32.start [1/16] %v260, 128
        %263 = vxpose.xlu0.b32.cont [2/16] 0.0, 128
        %264 = vxpose.xlu0.b32.cont [3/16] 0.0, 128
        %265 = vxpose.xlu0.b32.cont [4/16] 0.0, 128
        %266 = vxpose.xlu0.b32.cont [5/16] 0.0, 128
        %267 = vxpose.xlu0.b32.cont [6/16] 0.0, 128
        %268 = vxpose.xlu0.b32.cont [7/16] 0.0, 128
        %269 = vxpose.xlu0.b32.cont [8/16] 0.0, 128
        %270 = vxpose.xlu0.b32.cont [9/16] 0.0, 128
        %271 = vxpose.xlu0.b32.cont [10/16] 0.0, 128
        %272 = vxpose.xlu0.b32.cont [11/16] 0.0, 128
        %273 = vxpose.xlu0.b32.cont [12/16] 0.0, 128
        %274 = vxpose.xlu0.b32.cont [13/16] 0.0, 128
        %275 = vxpose.xlu0.b32.cont [14/16] 0.0, 128
        %276 = vxpose.xlu0.b32.cont [15/16] 0.0, 128
        %277 = vxpose.xlu0.b32.end [16/16] 0.0, 128
        %v278 = vpop.trf.xlu0
        %v279 = vpop.trf.xlu0
        %v280 = vpop.trf.xlu0
        %v281 = vpop.trf.xlu0
        %v282 = vpop.trf.xlu0
        %v283 = vpop.trf.xlu0
        %v284 = vpop.trf.xlu0
        %v285 = vpop.trf.xlu0
        %v286 = vpop.trf.xlu0
        %v287 = vpop.trf.xlu0
        %v288 = vpop.trf.xlu0
        %v289 = vpop.trf.xlu0
        %v290 = vpop.trf.xlu0
        %v291 = vpop.trf.xlu0
        %v292 = vpop.trf.xlu0
        %v293 = vpop.trf.xlu0
        %294 = vxpose.xlu0.b32.start [1/16] %v261, 128
        %295 = vxpose.xlu0.b32.cont [2/16] 0.0, 128
        %296 = vxpose.xlu0.b32.cont [3/16] 0.0, 128
        %297 = vxpose.xlu0.b32.cont [4/16] 0.0, 128
        %298 = vxpose.xlu0.b32.cont [5/16] 0.0, 128
        %299 = vxpose.xlu0.b32.cont [6/16] 0.0, 128
        %300 = vxpose.xlu0.b32.cont [7/16] 0.0, 128
        %301 = vxpose.xlu0.b32.cont [8/16] 0.0, 128
        %302 = vxpose.xlu0.b32.cont [9/16] 0.0, 128
        %303 = vxpose.xlu0.b32.cont [10/16] 0.0, 128
        %304 = vxpose.xlu0.b32.cont [11/16] 0.0, 128
        %305 = vxpose.xlu0.b32.cont [12/16] 0.0, 128
        %306 = vxpose.xlu0.b32.cont [13/16] 0.0, 128
        %307 = vxpose.xlu0.b32.cont [14/16] 0.0, 128
        %308 = vxpose.xlu0.b32.cont [15/16] 0.0, 128
        %309 = vxpose.xlu0.b32.end [16/16] 0.0, 128
        %v310 = vpop.trf.xlu0
        %v311 = vpop.trf.xlu0
        %v312 = vpop.trf.xlu0
        %v313 = vpop.trf.xlu0
        %v314 = vpop.trf.xlu0
        %v315 = vpop.trf.xlu0
        %v316 = vpop.trf.xlu0
        %v317 = vpop.trf.xlu0
        %v318 = vpop.trf.xlu0
        %v319 = vpop.trf.xlu0
        %v320 = vpop.trf.xlu0
        %v321 = vpop.trf.xlu0
        %v322 = vpop.trf.xlu0
        %v323 = vpop.trf.xlu0
        %v324 = vpop.trf.xlu0
        %v325 = vpop.trf.xlu0
        %vm326 = vcmask 64512
        %327 = vst.msk [vmem:[%s195] sm:$0xff] %vm326, %v278
        %328 = vst.msk [vmem:[%s195 + $0x8] sm:$0xff] %vm326, %v279
        %329 = vst.msk [vmem:[%s195 + $0x10] sm:$0xff] %vm326, %v280
        %330 = vst.msk [vmem:[%s195 + $0x18] sm:$0xff] %vm326, %v281
        %331 = vst.msk [vmem:[%s195 + $0x20] sm:$0xff] %vm326, %v282
        %332 = vst.msk [vmem:[%s195 + $0x28] sm:$0xff] %vm326, %v283
        %333 = vst.msk [vmem:[%s195 + $0x30] sm:$0xff] %vm326, %v284
        %334 = vst.msk [vmem:[%s195 + $0x38] sm:$0xff] %vm326, %v285
        %335 = vst.msk [vmem:[%s195 + $0x40] sm:$0xff] %vm326, %v286
        %336 = vst.msk [vmem:[%s195 + $0x48] sm:$0xff] %vm326, %v287
        %337 = vst.msk [vmem:[%s195 + $0x50] sm:$0xff] %vm326, %v288
        %338 = vst.msk [vmem:[%s195 + $0x58] sm:$0xff] %vm326, %v289
        %339 = vst.msk [vmem:[%s195 + $0x60] sm:$0xff] %vm326, %v290
        %340 = vst.msk [vmem:[%s195 + $0x68] sm:$0xff] %vm326, %v291
        %341 = vst.msk [vmem:[%s195 + $0x70] sm:$0xff] %vm326, %v292
        %342 = vst.msk [vmem:[%s195 + $0x78] sm:$0xff] %vm326, %v293
        %343 = vst.msk [vmem:[%s195 + $0x80] sm:$0xff] %vm326, %v310
        %344 = vst.msk [vmem:[%s195 + $0x88] sm:$0xff] %vm326, %v311
        %345 = vst.msk [vmem:[%s195 + $0x90] sm:$0xff] %vm326, %v312
        %346 = vst.msk [vmem:[%s195 + $0x98] sm:$0xff] %vm326, %v313
        %347 = vst.msk [vmem:[%s195 + $0xa0] sm:$0xff] %vm326, %v314
        %348 = vst.msk [vmem:[%s195 + $0xa8] sm:$0xff] %vm326, %v315
        %349 = vst.msk [vmem:[%s195 + $0xb0] sm:$0xff] %vm326, %v316
        %350 = vst.msk [vmem:[%s195 + $0xb8] sm:$0xff] %vm326, %v317
        %351 = vst.msk [vmem:[%s195 + $0xc0] sm:$0xff] %vm326, %v318
        %352 = vst.msk [vmem:[%s195 + $0xc8] sm:$0xff] %vm326, %v319
        %353 = vst.msk [vmem:[%s195 + $0xd0] sm:$0xff] %vm326, %v320
        %354 = vst.msk [vmem:[%s195 + $0xd8] sm:$0xff] %vm326, %v321
        %355 = vst.msk [vmem:[%s195 + $0xe0] sm:$0xff] %vm326, %v322
        %356 = vst.msk [vmem:[%s195 + $0xe8] sm:$0xff] %vm326, %v323
        %357 = vst.msk [vmem:[%s195 + $0xf0] sm:$0xff] %vm326, %v324
        %358 = vst.msk [vmem:[%s195 + $0xf8] sm:$0xff] %vm326, %v325
        %s359 = scalar_lea.vmem %s174, 16 [#allocation2]
        %v360 = vld [vmem:[%s359] sm:$0xff]
        %v361 = vld [vmem:[%s359 + $0x8] sm:$0xff]
        %v362 = vsub.f32 0.0, %v360
        %v363 = vsub.f32 0.0, %v361
        %v364 = vmul.f32 %v362, 1.442695
        %v365 = vpow.pop %v364
        %v366 = vmul.f32 %v363, 1.442695
        %v367 = vpow.pop %v366
        %v368 = vadd.f32 %v365, 1.0
        %v369 = vadd.f32 %v367, 1.0
        %v370 = vsel %vm247, %v365, %v368
        %v371 = vsel %vm247, %v367, %v369
        %v372 = vrcp.pop %v370
        %v373 = vrcp.pop %v371
        %v374 = vld [vmem:[%s200] sm:$0xff]
        %376 = vset.pattern.permute.xlu0 0
        %377 = vperm.xlu0 %376, %v374
        %v378 = vpop.permute.xlu0 %377
        %v380 = vmul.f32 %v372, %v378
        %v381 = vmul.f32 %v373, %v378
        %v382 = vadd.f32 %v380, %v234
        %v383 = vadd.f32 %v381, %v235
        %384 = vxpose.xlu0.b32.start [1/16] %v382, 128
        %385 = vxpose.xlu0.b32.cont [2/16] 0.0, 128
        %386 = vxpose.xlu0.b32.cont [3/16] 0.0, 128
        %387 = vxpose.xlu0.b32.cont [4/16] 0.0, 128
        %388 = vxpose.xlu0.b32.cont [5/16] 0.0, 128
        %389 = vxpose.xlu0.b32.cont [6/16] 0.0, 128
        %390 = vxpose.xlu0.b32.cont [7/16] 0.0, 128
        %391 = vxpose.xlu0.b32.cont [8/16] 0.0, 128
        %392 = vxpose.xlu0.b32.cont [9/16] 0.0, 128
        %393 = vxpose.xlu0.b32.cont [10/16] 0.0, 128
        %394 = vxpose.xlu0.b32.cont [11/16] 0.0, 128
        %395 = vxpose.xlu0.b32.cont [12/16] 0.0, 128
        %396 = vxpose.xlu0.b32.cont [13/16] 0.0, 128
        %397 = vxpose.xlu0.b32.cont [14/16] 0.0, 128
        %398 = vxpose.xlu0.b32.cont [15/16] 0.0, 128
        %399 = vxpose.xlu0.b32.end [16/16] 0.0, 128
        %v400 = vpop.trf.xlu0
        %v401 = vpop.trf.xlu0
        %v402 = vpop.trf.xlu0
        %v403 = vpop.trf.xlu0
        %v404 = vpop.trf.xlu0
        %v405 = vpop.trf.xlu0
        %v406 = vpop.trf.xlu0
        %v407 = vpop.trf.xlu0
        %v408 = vpop.trf.xlu0
        %v409 = vpop.trf.xlu0
        %v410 = vpop.trf.xlu0
        %v411 = vpop.trf.xlu0
        %v412 = vpop.trf.xlu0
        %v413 = vpop.trf.xlu0
        %v414 = vpop.trf.xlu0
        %v415 = vpop.trf.xlu0
        %416 = vxpose.xlu0.b32.start [1/16] %v383, 128
        %417 = vxpose.xlu0.b32.cont [2/16] 0.0, 128
        %418 = vxpose.xlu0.b32.cont [3/16] 0.0, 128
        %419 = vxpose.xlu0.b32.cont [4/16] 0.0, 128
        %420 = vxpose.xlu0.b32.cont [5/16] 0.0, 128
        %421 = vxpose.xlu0.b32.cont [6/16] 0.0, 128
        %422 = vxpose.xlu0.b32.cont [7/16] 0.0, 128
        %423 = vxpose.xlu0.b32.cont [8/16] 0.0, 128
        %424 = vxpose.xlu0.b32.cont [9/16] 0.0, 128
        %425 = vxpose.xlu0.b32.cont [10/16] 0.0, 128
        %426 = vxpose.xlu0.b32.cont [11/16] 0.0, 128
        %427 = vxpose.xlu0.b32.cont [12/16] 0.0, 128
        %428 = vxpose.xlu0.b32.cont [13/16] 0.0, 128
        %429 = vxpose.xlu0.b32.cont [14/16] 0.0, 128
        %430 = vxpose.xlu0.b32.cont [15/16] 0.0, 128
        %431 = vxpose.xlu0.b32.end [16/16] 0.0, 128
        %v432 = vpop.trf.xlu0
        %v433 = vpop.trf.xlu0
        %v434 = vpop.trf.xlu0
        %v435 = vpop.trf.xlu0
        %v436 = vpop.trf.xlu0
        %v437 = vpop.trf.xlu0
        %v438 = vpop.trf.xlu0
        %v439 = vpop.trf.xlu0
        %v440 = vpop.trf.xlu0
        %v441 = vpop.trf.xlu0
        %v442 = vpop.trf.xlu0
        %v443 = vpop.trf.xlu0
        %v444 = vpop.trf.xlu0
        %v445 = vpop.trf.xlu0
        %v446 = vpop.trf.xlu0
        %v447 = vpop.trf.xlu0
        %s448 = scalar_lea.vmem %s195, 256 [#allocation3]
        %449 = vst.msk [vmem:[%s448] sm:$0xff] %vm326, %v400
        %450 = vst.msk [vmem:[%s448 + $0x8] sm:$0xff] %vm326, %v401
        %451 = vst.msk [vmem:[%s448 + $0x10] sm:$0xff] %vm326, %v402
        %452 = vst.msk [vmem:[%s448 + $0x18] sm:$0xff] %vm326, %v403
        %453 = vst.msk [vmem:[%s448 + $0x20] sm:$0xff] %vm326, %v404
        %454 = vst.msk [vmem:[%s448 + $0x28] sm:$0xff] %vm326, %v405
        %455 = vst.msk [vmem:[%s448 + $0x30] sm:$0xff] %vm326, %v406
        %456 = vst.msk [vmem:[%s448 + $0x38] sm:$0xff] %vm326, %v407
        %457 = vst.msk [vmem:[%s448 + $0x40] sm:$0xff] %vm326, %v408
        %458 = vst.msk [vmem:[%s448 + $0x48] sm:$0xff] %vm326, %v409
        %459 = vst.msk [vmem:[%s448 + $0x50] sm:$0xff] %vm326, %v410
        %460 = vst.msk [vmem:[%s448 + $0x58] sm:$0xff] %vm326, %v411
        %461 = vst.msk [vmem:[%s448 + $0x60] sm:$0xff] %vm326, %v412
        %462 = vst.msk [vmem:[%s448 + $0x68] sm:$0xff] %vm326, %v413
        %463 = vst.msk [vmem:[%s448 + $0x70] sm:$0xff] %vm326, %v414
        %464 = vst.msk [vmem:[%s448 + $0x78] sm:$0xff] %vm326, %v415
        %465 = vst.msk [vmem:[%s448 + $0x80] sm:$0xff] %vm326, %v432
        %466 = vst.msk [vmem:[%s448 + $0x88] sm:$0xff] %vm326, %v433
        %467 = vst.msk [vmem:[%s448 + $0x90] sm:$0xff] %vm326, %v434
        %468 = vst.msk [vmem:[%s448 + $0x98] sm:$0xff] %vm326, %v435
        %469 = vst.msk [vmem:[%s448 + $0xa0] sm:$0xff] %vm326, %v436
        %470 = vst.msk [vmem:[%s448 + $0xa8] sm:$0xff] %vm326, %v437
        %471 = vst.msk [vmem:[%s448 + $0xb0] sm:$0xff] %vm326, %v438
        %472 = vst.msk [vmem:[%s448 + $0xb8] sm:$0xff] %vm326, %v439
        %473 = vst.msk [vmem:[%s448 + $0xc0] sm:$0xff] %vm326, %v440
        %474 = vst.msk [vmem:[%s448 + $0xc8] sm:$0xff] %vm326, %v441
        %475 = vst.msk [vmem:[%s448 + $0xd0] sm:$0xff] %vm326, %v442
        %476 = vst.msk [vmem:[%s448 + $0xd8] sm:$0xff] %vm326, %v443
        %477 = vst.msk [vmem:[%s448 + $0xe0] sm:$0xff] %vm326, %v444
        %478 = vst.msk [vmem:[%s448 + $0xe8] sm:$0xff] %vm326, %v445
        %479 = vst.msk [vmem:[%s448 + $0xf0] sm:$0xff] %vm326, %v446
        %480 = vst.msk [vmem:[%s448 + $0xf8] sm:$0xff] %vm326, %v447
        %s481 = sand.u32 %s89, 1
        %s482 = sand.u32 %s89, 1
        %s483 = smul.addr %s482, 512
        %s484 = scalar_lea.vmem [#allocation3], %s483
        // Predicated region
        $region52: #{forward.1} parent=46 // pred_check
          %p485 = pneg %p99
        $region53: #{forward.1} parent=46 // pred_check_branch
          %487 = sbr.rel (%p485) target = $region55
        $region54: #{forward.1} parent=46 // pred_region
          %s488 = smul.u32 2, %s17
          %s489 = smul.addr %s18, 32
          %s490 = smul.addr %s488, 96
          %s491 = sadd.s32 %s489, %s490
          %s492 = smul.addr %s491, 8
          %s493 = scalar_lea.vmem %s2, %s492
          // Predicated region
          $region56: #{forward.1} parent=54 // pred_check
            _
          $region57: #{forward.1} parent=54 // pred_check_branch
            %495 = sbr.rel (0) target = $region59
          $region58: #{forward.1} parent=54 // pred_region
            // Predicated region
            $region60: #{forward.1} parent=58 // pred_check
              _
            $region61: #{forward.1} parent=58 // pred_check_branch
              %497 = sbr.rel (0) target = $region63
            $region62: #{forward.1} parent=58 // pred_region
              // Predicated region
              $region75: #{forward.1} parent=62 // pred_check
                _
              $region76: #{forward.1} parent=62 // pred_check_branch
                %639 = sbr.rel (0) target = $region78
              $region77: #{forward.1} parent=62 // pred_region
                loop: start=0, step=1, limit=1
                $region79: #{forward.1} parent=77 // loop_pre_header
                  _
                $region80: #{forward.1} parent=77 // loop_header
                  %s641 = sphi 0, %s645
                  %p642 = scmp.ge.s32.totalorder %s641, 1
                  %s646 = sphi %s484, %s484
                  %s647 = sphi %s493, %s493
                $region81: #{forward.1} parent=77 // loop_header_branch
                  %644 = sbr.rel (%p642) target = $region85
                $region82: #{forward.1} parent=77 // loop_body
                  %v648 = vld [vmem:[%s646] sm:$0xff]
                  %649 = vst [vmem:[%s647] sm:$0xff] %v648
                  %v650 = vld [vmem:[%s646 + $0x8] sm:$0xff]
                  %651 = vst [vmem:[%s647 + $0x8] sm:$0xff] %v650
                  %v652 = vld [vmem:[%s646 + $0x10] sm:$0xff]
                  %653 = vst [vmem:[%s647 + $0x10] sm:$0xff] %v652
                  %v654 = vld [vmem:[%s646 + $0x18] sm:$0xff]
                  %655 = vst [vmem:[%s647 + $0x18] sm:$0xff] %v654
                  %v656 = vld [vmem:[%s646 + $0x20] sm:$0xff]
                  %657 = vst [vmem:[%s647 + $0x20] sm:$0xff] %v656
                  %v658 = vld [vmem:[%s646 + $0x28] sm:$0xff]
                  %659 = vst [vmem:[%s647 + $0x28] sm:$0xff] %v658
                  %v660 = vld [vmem:[%s646 + $0x30] sm:$0xff]
                  %661 = vst [vmem:[%s647 + $0x30] sm:$0xff] %v660
                  %v662 = vld [vmem:[%s646 + $0x38] sm:$0xff]
                  %663 = vst [vmem:[%s647 + $0x38] sm:$0xff] %v662
                  %v664 = vld [vmem:[%s646 + $0x40] sm:$0xff]
                  %665 = vst [vmem:[%s647 + $0x40] sm:$0xff] %v664
                  %v666 = vld [vmem:[%s646 + $0x48] sm:$0xff]
                  %667 = vst [vmem:[%s647 + $0x48] sm:$0xff] %v666
                  %v668 = vld [vmem:[%s646 + $0x50] sm:$0xff]
                  %669 = vst [vmem:[%s647 + $0x50] sm:$0xff] %v668
                  %v670 = vld [vmem:[%s646 + $0x58] sm:$0xff]
                  %671 = vst [vmem:[%s647 + $0x58] sm:$0xff] %v670
                  %v672 = vld [vmem:[%s646 + $0x60] sm:$0xff]
                  %673 = vst [vmem:[%s647 + $0x60] sm:$0xff] %v672
                  %v674 = vld [vmem:[%s646 + $0x68] sm:$0xff]
                  %675 = vst [vmem:[%s647 + $0x68] sm:$0xff] %v674
                  %v676 = vld [vmem:[%s646 + $0x70] sm:$0xff]
                  %677 = vst [vmem:[%s647 + $0x70] sm:$0xff] %v676
                  %v678 = vld [vmem:[%s646 + $0x78] sm:$0xff]
                  %679 = vst [vmem:[%s647 + $0x78] sm:$0xff] %v678
                  %v680 = vld [vmem:[%s646 + $0x80] sm:$0xff]
                  %681 = vst [vmem:[%s647 + $0x80] sm:$0xff] %v680
                  %v682 = vld [vmem:[%s646 + $0x88] sm:$0xff]
                  %683 = vst [vmem:[%s647 + $0x88] sm:$0xff] %v682
                  %v684 = vld [vmem:[%s646 + $0x90] sm:$0xff]
                  %685 = vst [vmem:[%s647 + $0x90] sm:$0xff] %v684
                  %v686 = vld [vmem:[%s646 + $0x98] sm:$0xff]
                  %687 = vst [vmem:[%s647 + $0x98] sm:$0xff] %v686
                  %v688 = vld [vmem:[%s646 + $0xa0] sm:$0xff]
                  %689 = vst [vmem:[%s647 + $0xa0] sm:$0xff] %v688
                  %v690 = vld [vmem:[%s646 + $0xa8] sm:$0xff]
                  %691 = vst [vmem:[%s647 + $0xa8] sm:$0xff] %v690
                  %v692 = vld [vmem:[%s646 + $0xb0] sm:$0xff]
                  %693 = vst [vmem:[%s647 + $0xb0] sm:$0xff] %v692
                  %v694 = vld [vmem:[%s646 + $0xb8] sm:$0xff]
                  %695 = vst [vmem:[%s647 + $0xb8] sm:$0xff] %v694
                  %v696 = vld [vmem:[%s646 + $0xc0] sm:$0xff]
                  %697 = vst [vmem:[%s647 + $0xc0] sm:$0xff] %v696
                  %v698 = vld [vmem:[%s646 + $0xc8] sm:$0xff]
                  %699 = vst [vmem:[%s647 + $0xc8] sm:$0xff] %v698
                  %v700 = vld [vmem:[%s646 + $0xd0] sm:$0xff]
                  %701 = vst [vmem:[%s647 + $0xd0] sm:$0xff] %v700
                  %v702 = vld [vmem:[%s646 + $0xd8] sm:$0xff]
                  %703 = vst [vmem:[%s647 + $0xd8] sm:$0xff] %v702
                  %v704 = vld [vmem:[%s646 + $0xe0] sm:$0xff]
                  %705 = vst [vmem:[%s647 + $0xe0] sm:$0xff] %v704
                  %v706 = vld [vmem:[%s646 + $0xe8] sm:$0xff]
                  %707 = vst [vmem:[%s647 + $0xe8] sm:$0xff] %v706
                  %v708 = vld [vmem:[%s646 + $0xf0] sm:$0xff]
                  %709 = vst [vmem:[%s647 + $0xf0] sm:$0xff] %v708
                  %v710 = vld [vmem:[%s646 + $0xf8] sm:$0xff]
                  %711 = vst [vmem:[%s647 + $0xf8] sm:$0xff] %v710
                  %v712 = vld [vmem:[%s646 + $0x100] sm:$0xff]
                  %713 = vst [vmem:[%s647 + $0x300] sm:$0xff] %v712
                  %v714 = vld [vmem:[%s646 + $0x108] sm:$0xff]
                  %715 = vst [vmem:[%s647 + $0x308] sm:$0xff] %v714
                  %v716 = vld [vmem:[%s646 + $0x110] sm:$0xff]
                  %717 = vst [vmem:[%s647 + $0x310] sm:$0xff] %v716
                  %v718 = vld [vmem:[%s646 + $0x118] sm:$0xff]
                  %719 = vst [vmem:[%s647 + $0x318] sm:$0xff] %v718
                  %v720 = vld [vmem:[%s646 + $0x120] sm:$0xff]
                  %721 = vst [vmem:[%s647 + $0x320] sm:$0xff] %v720
                  %v722 = vld [vmem:[%s646 + $0x128] sm:$0xff]
                  %723 = vst [vmem:[%s647 + $0x328] sm:$0xff] %v722
                  %v724 = vld [vmem:[%s646 + $0x130] sm:$0xff]
                  %725 = vst [vmem:[%s647 + $0x330] sm:$0xff] %v724
                  %v726 = vld [vmem:[%s646 + $0x138] sm:$0xff]
                  %727 = vst [vmem:[%s647 + $0x338] sm:$0xff] %v726
                  %v728 = vld [vmem:[%s646 + $0x140] sm:$0xff]
                  %729 = vst [vmem:[%s647 + $0x340] sm:$0xff] %v728
                  %v730 = vld [vmem:[%s646 + $0x148] sm:$0xff]
                  %731 = vst [vmem:[%s647 + $0x348] sm:$0xff] %v730
                  %v732 = vld [vmem:[%s646 + $0x150] sm:$0xff]
                  %733 = vst [vmem:[%s647 + $0x350] sm:$0xff] %v732
                  %v734 = vld [vmem:[%s646 + $0x158] sm:$0xff]
                  %735 = vst [vmem:[%s647 + $0x358] sm:$0xff] %v734
                  %v736 = vld [vmem:[%s646 + $0x160] sm:$0xff]
                  %737 = vst [vmem:[%s647 + $0x360] sm:$0xff] %v736
                  %v738 = vld [vmem:[%s646 + $0x168] sm:$0xff]
                  %739 = vst [vmem:[%s647 + $0x368] sm:$0xff] %v738
                  %v740 = vld [vmem:[%s646 + $0x170] sm:$0xff]
                  %741 = vst [vmem:[%s647 + $0x370] sm:$0xff] %v740
                  %v742 = vld [vmem:[%s646 + $0x178] sm:$0xff]
                  %743 = vst [vmem:[%s647 + $0x378] sm:$0xff] %v742
                  %v744 = vld [vmem:[%s646 + $0x180] sm:$0xff]
                  %745 = vst [vmem:[%s647 + $0x380] sm:$0xff] %v744
                  %v746 = vld [vmem:[%s646 + $0x188] sm:$0xff]
                  %747 = vst [vmem:[%s647 + $0x388] sm:$0xff] %v746
                  %v748 = vld [vmem:[%s646 + $0x190] sm:$0xff]
                  %749 = vst [vmem:[%s647 + $0x390] sm:$0xff] %v748
                  %v750 = vld [vmem:[%s646 + $0x198] sm:$0xff]
                  %751 = vst [vmem:[%s647 + $0x398] sm:$0xff] %v750
                  %v752 = vld [vmem:[%s646 + $0x1a0] sm:$0xff]
                  %753 = vst [vmem:[%s647 + $0x3a0] sm:$0xff] %v752
                  %v754 = vld [vmem:[%s646 + $0x1a8] sm:$0xff]
                  %755 = vst [vmem:[%s647 + $0x3a8] sm:$0xff] %v754
                  %v756 = vld [vmem:[%s646 + $0x1b0] sm:$0xff]
                  %757 = vst [vmem:[%s647 + $0x3b0] sm:$0xff] %v756
                  %v758 = vld [vmem:[%s646 + $0x1b8] sm:$0xff]
                  %759 = vst [vmem:[%s647 + $0x3b8] sm:$0xff] %v758
                  %v760 = vld [vmem:[%s646 + $0x1c0] sm:$0xff]
                  %761 = vst [vmem:[%s647 + $0x3c0] sm:$0xff] %v760
                  %v762 = vld [vmem:[%s646 + $0x1c8] sm:$0xff]
                  %763 = vst [vmem:[%s647 + $0x3c8] sm:$0xff] %v762
                  %v764 = vld [vmem:[%s646 + $0x1d0] sm:$0xff]
                  %765 = vst [vmem:[%s647 + $0x3d0] sm:$0xff] %v764
                  %v766 = vld [vmem:[%s646 + $0x1d8] sm:$0xff]
                  %767 = vst [vmem:[%s647 + $0x3d8] sm:$0xff] %v766
                  %v768 = vld [vmem:[%s646 + $0x1e0] sm:$0xff]
                  %769 = vst [vmem:[%s647 + $0x3e0] sm:$0xff] %v768
                  %v770 = vld [vmem:[%s646 + $0x1e8] sm:$0xff]
                  %771 = vst [vmem:[%s647 + $0x3e8] sm:$0xff] %v770
                  %v772 = vld [vmem:[%s646 + $0x1f0] sm:$0xff]
                  %773 = vst [vmem:[%s647 + $0x3f0] sm:$0xff] %v772
                  %v774 = vld [vmem:[%s646 + $0x1f8] sm:$0xff]
                  %775 = vst [vmem:[%s647 + $0x3f8] sm:$0xff] %v774
                $region83: #{forward.1} parent=77 // loop_footer
                  %s645 = sadd.s32 1, %s641
                $region84: #{forward.1} parent=77 // loop_footer_branch
                  %640 = sbr.rel target = $region80
                $region85: #{forward.1} parent=77 // loop_exit
                  _
              $region78: #{forward.1} parent=62 // pred_fallthru
                _
              // Predicated region
              $region86: #{forward.1} parent=62 // pred_check
                _
              $region87: #{forward.1} parent=62 // pred_check_branch
                %777 = sbr.rel target = $region89
              $region88: #{forward.1} parent=62 // pred_region
                _
              $region89: #{forward.1} parent=62 // pred_fallthru
                _
            $region63: #{forward.1} parent=58 // pred_fallthru
              _
            // Predicated region
            $region64: #{forward.1} parent=58 // pred_check
              _
            $region65: #{forward.1} parent=58 // pred_check_branch
              %499 = sbr.rel target = $region67
            $region66: #{forward.1} parent=58 // pred_region
              %s501 = ssub.s32 256, 1
              loop: start=0, step=1, limit=1
              $region68: #{forward.1} parent=66 // loop_pre_header
                _
              $region69: #{forward.1} parent=66 // loop_header
                %s503 = sphi 0, %s507
                %p504 = scmp.ge.s32.totalorder %s503, 1
                %s508 = sphi %s484, %s484
                %s509 = sphi %s493, %s493
              $region70: #{forward.1} parent=66 // loop_header_branch
                %506 = sbr.rel (%p504) target = $region74
              $region71: #{forward.1} parent=66 // loop_body
                %v510 = vld [vmem:[%s508] sm:%s501]
                %511 = vst [vmem:[%s509] sm:%s501] %v510
                %v512 = vld [vmem:[%s508 + $0x8] sm:%s501]
                %513 = vst [vmem:[%s509 + $0x8] sm:%s501] %v512
                %v514 = vld [vmem:[%s508 + $0x10] sm:%s501]
                %515 = vst [vmem:[%s509 + $0x10] sm:%s501] %v514
                %v516 = vld [vmem:[%s508 + $0x18] sm:%s501]
                %517 = vst [vmem:[%s509 + $0x18] sm:%s501] %v516
                %v518 = vld [vmem:[%s508 + $0x20] sm:%s501]
                %519 = vst [vmem:[%s509 + $0x20] sm:%s501] %v518
                %v520 = vld [vmem:[%s508 + $0x28] sm:%s501]
                %521 = vst [vmem:[%s509 + $0x28] sm:%s501] %v520
                %v522 = vld [vmem:[%s508 + $0x30] sm:%s501]
                %523 = vst [vmem:[%s509 + $0x30] sm:%s501] %v522
                %v524 = vld [vmem:[%s508 + $0x38] sm:%s501]
                %525 = vst [vmem:[%s509 + $0x38] sm:%s501] %v524
                %v526 = vld [vmem:[%s508 + $0x40] sm:%s501]
                %527 = vst [vmem:[%s509 + $0x40] sm:%s501] %v526
                %v528 = vld [vmem:[%s508 + $0x48] sm:%s501]
                %529 = vst [vmem:[%s509 + $0x48] sm:%s501] %v528
                %v530 = vld [vmem:[%s508 + $0x50] sm:%s501]
                %531 = vst [vmem:[%s509 + $0x50] sm:%s501] %v530
                %v532 = vld [vmem:[%s508 + $0x58] sm:%s501]
                %533 = vst [vmem:[%s509 + $0x58] sm:%s501] %v532
                %v534 = vld [vmem:[%s508 + $0x60] sm:%s501]
                %535 = vst [vmem:[%s509 + $0x60] sm:%s501] %v534
                %v536 = vld [vmem:[%s508 + $0x68] sm:%s501]
                %537 = vst [vmem:[%s509 + $0x68] sm:%s501] %v536
                %v538 = vld [vmem:[%s508 + $0x70] sm:%s501]
                %539 = vst [vmem:[%s509 + $0x70] sm:%s501] %v538
                %v540 = vld [vmem:[%s508 + $0x78] sm:%s501]
                %541 = vst [vmem:[%s509 + $0x78] sm:%s501] %v540
                %v542 = vld [vmem:[%s508 + $0x80] sm:%s501]
                %543 = vst [vmem:[%s509 + $0x80] sm:%s501] %v542
                %v544 = vld [vmem:[%s508 + $0x88] sm:%s501]
                %545 = vst [vmem:[%s509 + $0x88] sm:%s501] %v544
                %v546 = vld [vmem:[%s508 + $0x90] sm:%s501]
                %547 = vst [vmem:[%s509 + $0x90] sm:%s501] %v546
                %v548 = vld [vmem:[%s508 + $0x98] sm:%s501]
                %549 = vst [vmem:[%s509 + $0x98] sm:%s501] %v548
                %v550 = vld [vmem:[%s508 + $0xa0] sm:%s501]
                %551 = vst [vmem:[%s509 + $0xa0] sm:%s501] %v550
                %v552 = vld [vmem:[%s508 + $0xa8] sm:%s501]
                %553 = vst [vmem:[%s509 + $0xa8] sm:%s501] %v552
                %v554 = vld [vmem:[%s508 + $0xb0] sm:%s501]
                %555 = vst [vmem:[%s509 + $0xb0] sm:%s501] %v554
                %v556 = vld [vmem:[%s508 + $0xb8] sm:%s501]
                %557 = vst [vmem:[%s509 + $0xb8] sm:%s501] %v556
                %v558 = vld [vmem:[%s508 + $0xc0] sm:%s501]
                %559 = vst [vmem:[%s509 + $0xc0] sm:%s501] %v558
                %v560 = vld [vmem:[%s508 + $0xc8] sm:%s501]
                %561 = vst [vmem:[%s509 + $0xc8] sm:%s501] %v560
                %v562 = vld [vmem:[%s508 + $0xd0] sm:%s501]
                %563 = vst [vmem:[%s509 + $0xd0] sm:%s501] %v562
                %v564 = vld [vmem:[%s508 + $0xd8] sm:%s501]
                %565 = vst [vmem:[%s509 + $0xd8] sm:%s501] %v564
                %v566 = vld [vmem:[%s508 + $0xe0] sm:%s501]
                %567 = vst [vmem:[%s509 + $0xe0] sm:%s501] %v566
                %v568 = vld [vmem:[%s508 + $0xe8] sm:%s501]
                %569 = vst [vmem:[%s509 + $0xe8] sm:%s501] %v568
                %v570 = vld [vmem:[%s508 + $0xf0] sm:%s501]
                %571 = vst [vmem:[%s509 + $0xf0] sm:%s501] %v570
                %v572 = vld [vmem:[%s508 + $0xf8] sm:%s501]
                %573 = vst [vmem:[%s509 + $0xf8] sm:%s501] %v572
                %v574 = vld [vmem:[%s508 + $0x100] sm:%s501]
                %575 = vst [vmem:[%s509 + $0x300] sm:%s501] %v574
                %v576 = vld [vmem:[%s508 + $0x108] sm:%s501]
                %577 = vst [vmem:[%s509 + $0x308] sm:%s501] %v576
                %v578 = vld [vmem:[%s508 + $0x110] sm:%s501]
                %579 = vst [vmem:[%s509 + $0x310] sm:%s501] %v578
                %v580 = vld [vmem:[%s508 + $0x118] sm:%s501]
                %581 = vst [vmem:[%s509 + $0x318] sm:%s501] %v580
                %v582 = vld [vmem:[%s508 + $0x120] sm:%s501]
                %583 = vst [vmem:[%s509 + $0x320] sm:%s501] %v582
                %v584 = vld [vmem:[%s508 + $0x128] sm:%s501]
                %585 = vst [vmem:[%s509 + $0x328] sm:%s501] %v584
                %v586 = vld [vmem:[%s508 + $0x130] sm:%s501]
                %587 = vst [vmem:[%s509 + $0x330] sm:%s501] %v586
                %v588 = vld [vmem:[%s508 + $0x138] sm:%s501]
                %589 = vst [vmem:[%s509 + $0x338] sm:%s501] %v588
                %v590 = vld [vmem:[%s508 + $0x140] sm:%s501]
                %591 = vst [vmem:[%s509 + $0x340] sm:%s501] %v590
                %v592 = vld [vmem:[%s508 + $0x148] sm:%s501]
                %593 = vst [vmem:[%s509 + $0x348] sm:%s501] %v592
                %v594 = vld [vmem:[%s508 + $0x150] sm:%s501]
                %595 = vst [vmem:[%s509 + $0x350] sm:%s501] %v594
                %v596 = vld [vmem:[%s508 + $0x158] sm:%s501]
                %597 = vst [vmem:[%s509 + $0x358] sm:%s501] %v596
                %v598 = vld [vmem:[%s508 + $0x160] sm:%s501]
                %599 = vst [vmem:[%s509 + $0x360] sm:%s501] %v598
                %v600 = vld [vmem:[%s508 + $0x168] sm:%s501]
                %601 = vst [vmem:[%s509 + $0x368] sm:%s501] %v600
                %v602 = vld [vmem:[%s508 + $0x170] sm:%s501]
                %603 = vst [vmem:[%s509 + $0x370] sm:%s501] %v602
                %v604 = vld [vmem:[%s508 + $0x178] sm:%s501]
                %605 = vst [vmem:[%s509 + $0x378] sm:%s501] %v604
                %v606 = vld [vmem:[%s508 + $0x180] sm:%s501]
                %607 = vst [vmem:[%s509 + $0x380] sm:%s501] %v606
                %v608 = vld [vmem:[%s508 + $0x188] sm:%s501]
                %609 = vst [vmem:[%s509 + $0x388] sm:%s501] %v608
                %v610 = vld [vmem:[%s508 + $0x190] sm:%s501]
                %611 = vst [vmem:[%s509 + $0x390] sm:%s501] %v610
                %v612 = vld [vmem:[%s508 + $0x198] sm:%s501]
                %613 = vst [vmem:[%s509 + $0x398] sm:%s501] %v612
                %v614 = vld [vmem:[%s508 + $0x1a0] sm:%s501]
                %615 = vst [vmem:[%s509 + $0x3a0] sm:%s501] %v614
                %v616 = vld [vmem:[%s508 + $0x1a8] sm:%s501]
                %617 = vst [vmem:[%s509 + $0x3a8] sm:%s501] %v616
                %v618 = vld [vmem:[%s508 + $0x1b0] sm:%s501]
                %619 = vst [vmem:[%s509 + $0x3b0] sm:%s501] %v618
                %v620 = vld [vmem:[%s508 + $0x1b8] sm:%s501]
                %621 = vst [vmem:[%s509 + $0x3b8] sm:%s501] %v620
                %v622 = vld [vmem:[%s508 + $0x1c0] sm:%s501]
                %623 = vst [vmem:[%s509 + $0x3c0] sm:%s501] %v622
                %v624 = vld [vmem:[%s508 + $0x1c8] sm:%s501]
                %625 = vst [vmem:[%s509 + $0x3c8] sm:%s501] %v624
                %v626 = vld [vmem:[%s508 + $0x1d0] sm:%s501]
                %627 = vst [vmem:[%s509 + $0x3d0] sm:%s501] %v626
                %v628 = vld [vmem:[%s508 + $0x1d8] sm:%s501]
                %629 = vst [vmem:[%s509 + $0x3d8] sm:%s501] %v628
                %v630 = vld [vmem:[%s508 + $0x1e0] sm:%s501]
                %631 = vst [vmem:[%s509 + $0x3e0] sm:%s501] %v630
                %v632 = vld [vmem:[%s508 + $0x1e8] sm:%s501]
                %633 = vst [vmem:[%s509 + $0x3e8] sm:%s501] %v632
                %v634 = vld [vmem:[%s508 + $0x1f0] sm:%s501]
                %635 = vst [vmem:[%s509 + $0x3f0] sm:%s501] %v634
                %v636 = vld [vmem:[%s508 + $0x1f8] sm:%s501]
                %637 = vst [vmem:[%s509 + $0x3f8] sm:%s501] %v636
              $region72: #{forward.1} parent=66 // loop_footer
                %s507 = sadd.s32 1, %s503
              $region73: #{forward.1} parent=66 // loop_footer_branch
                %502 = sbr.rel target = $region69
              $region74: #{forward.1} parent=66 // loop_exit
                _
            $region67: #{forward.1} parent=58 // pred_fallthru
              _
          $region59: #{forward.1} parent=54 // pred_fallthru
            _
          %778 = vnop
        $region55: #{forward.1} parent=46 // pred_fallthru
          _
      $region47: #{forward.1} parent=5 // pred_fallthru
        _
      %p779 = scmp.le.s32.totalorder 2, %s8
      // Predicated region
      $region90: #{forward.1} parent=5 // pred_check
        %p780 = pneg %p779
      $region91: #{forward.1} parent=5 // pred_check_branch
        %782 = sbr.rel (%p780) target = $region93
      $region92: #{forward.1} parent=5 // pred_region
        %s783 = ssub.s32 %s8, 2
        // Predicated region
        $region94: #{forward.1} parent=92 // pred_check
          %p784 = pneg %p105
        $region95: #{forward.1} parent=92 // pred_check_branch
          %786 = sbr.rel (%p784) target = $region97
        $region96: #{forward.1} parent=92 // pred_region
          %s787 = sand.u32 %s90, 1
          %s788 = sand.u32 %s90, 1
          %s789 = smul.addr %s788, 512
          %s790 = scalar_lea.vmem [#allocation3], %s789
        $region97: #{forward.1} parent=92 // pred_fallthru
          _
      $region93: #{forward.1} parent=5 // pred_fallthru
        _
    $region6: #{forward.1} parent=1 // loop_footer
      %s12 = sadd.s32 1, %s8
    $region7: #{forward.1} parent=1 // loop_footer_branch
      %7 = sbr.rel target = $region3
    $region8: #{forward.1} parent=1 // loop_exit
      _

</llo_original>
